<compile_context>
chip_gen: v7x
topology: tpu7x:2x2x1
jax: 0.10.0
libtpu: 0.0.40
codegen_flags: <defaults>
</compile_context>

<pallas_src>
import math
import functools

import jax
import jax.numpy as jnp
from jax.experimental import pallas as pl
from jax.experimental.pallas import tpu as pltpu


def gcn_kernel(w1_ref, b1_ref, w2t_ref, b2_ref, x_ref, o_ref, *, bt):
    # w1_ref : (C, C)   conv1d_1 weight (kernel dim squeezed)
    # b1_ref : (C, 1)   conv1d_1 bias (column, broadcast over lanes)
    # w2t_ref: (L, L)   conv1d_2 weight, pre-transposed (W2.T)
    # b2_ref : (1, L)   conv1d_2 bias (row, broadcast over sublanes)
    # x_ref  : (bt, C, L) batch tile
    w1 = w1_ref[...]
    b1 = b1_ref[...]
    w2t = w2t_ref[...]
    b2 = b2_ref[...]
    for b in range(bt):  # static unroll; bt is kept small (<= 8)
        xb = x_ref[b]                                             # (C, L)
        h = jnp.dot(w1, xb, preferred_element_type=jnp.float32) + b1
        y = jnp.dot(h, w2t, preferred_element_type=jnp.float32) + b2
        o_ref[b] = y.astype(o_ref.dtype)


def gcn_forward(x, w1, b1, w2, b2, *,
                vmem_budget_bytes=8 * 1024 * 1024, max_bt=8):
    """x: (B, C, L) f32; w1: (C, C); b1: (C,); w2: (L, L); b2: (L,)."""
    B, C, L = x.shape
    assert w1.shape == (C, C) and b1.shape == (C,)
    assert w2.shape == (L, L) and b2.shape == (L,)

    # Batch elements per grid step: amortize per-step overhead while keeping
    # the double-buffered x + out tiles within a conservative VMEM budget.
    per_b = 2 * 2 * C * L * x.dtype.itemsize   # (in + out) x double-buffer
    bt = int(max(1, min(B, max_bt, vmem_budget_bytes // max(per_b, 1))))
    while B % bt != 0:
        bt -= 1
    grid = (B // bt,)

    kernel = functools.partial(gcn_kernel, bt=bt)

    out = pl.pallas_call(
        kernel,
        out_shape=jax.ShapeDtypeStruct((B, C, L), x.dtype),
        grid_spec=pltpu.PrefetchScalarGridSpec(
            num_scalar_prefetch=0,
            grid=grid,
            in_specs=[
                pl.BlockSpec((C, C), lambda i: (0, 0)),        # W1    (resident)
                pl.BlockSpec((C, 1), lambda i: (0, 0)),        # b1    (resident)
                pl.BlockSpec((L, L), lambda i: (0, 0)),        # W2^T  (resident)
                pl.BlockSpec((1, L), lambda i: (0, 0)),        # b2    (resident)
                pl.BlockSpec((bt, C, L), lambda i: (i, 0, 0)),  # x tile
            ],
            out_specs=pl.BlockSpec((bt, C, L), lambda i: (i, 0, 0)),
        ),
        compiler_params=pltpu.CompilerParams(
            dimension_semantics=("parallel",)),   # shards across v7x's 2 TCs
    )(w1, b1.reshape(C, 1), jnp.transpose(w2), b2.reshape(1, L), x)
    return out


if __name__ == "__main__":
    key = jax.random.PRNGKey(0)
    kx, kw1, kb1, kw2, kb2 = jax.random.split(key, 5)

    B = 2
    dim_1 = 4    # dim_1_channels
    dim_2 = 16   # dim_2_channels (== last axis of x)

    x = jax.random.normal(kx, (B, dim_1, dim_2), dtype=jnp.float32)

    # PyTorch Conv1d default init: U(-1/sqrt(fan_in*k), 1/sqrt(fan_in*k)), k=1.
    bnd1 = 1.0 / math.sqrt(dim_1)
    w1 = jax.random.uniform(kw1, (dim_1, dim_1), minval=-bnd1, maxval=bnd1,
                            dtype=jnp.float32)
    b1 = jax.random.uniform(kb1, (dim_1,), minval=-bnd1, maxval=bnd1,
                            dtype=jnp.float32)
    bnd2 = 1.0 / math.sqrt(dim_2)
    w2 = jax.random.uniform(kw2, (dim_2, dim_2), minval=-bnd2, maxval=bnd2,
                            dtype=jnp.float32)
    b2 = jax.random.uniform(kb2, (dim_2,), minval=-bnd2, maxval=bnd2,
                            dtype=jnp.float32)

    out = jax.block_until_ready(gcn_forward(x, w1, b1, w2, b2))

    # Pure-JAX reference mirroring the PyTorch forward exactly.
    h = jnp.einsum('oi,bil->bol', w1, x) + b1[None, :, None]     # conv1d_1
    hp = jnp.transpose(h, (0, 2, 1))                             # permute(0,2,1)
    y = jnp.einsum('kl,blc->bkc', w2, hp) + b2[None, :, None]    # conv1d_2
    ref = jnp.transpose(y, (0, 2, 1))                            # permute(0,2,1)

    assert out.shape == ref.shape
    assert jnp.allclose(out, ref, atol=1e-5, rtol=1e-5), "mismatch vs reference"

    print("KERNEL_OK")
</pallas_src>

<mosaic_0001>
module attributes {stable_mosaic.version = 11 : i64} {
  func.func @gcn_kernel(%arg0: i32, %arg1: memref<4x4xf32, #tpu.memory_space<vmem>>, %arg2: memref<4x1xf32, #tpu.memory_space<vmem>>, %arg3: memref<16x16xf32, #tpu.memory_space<vmem>>, %arg4: memref<1x16xf32, #tpu.memory_space<vmem>>, %arg5: memref<2x4x16xf32, #tpu.memory_space<vmem>>, %arg6: memref<2x4x16xf32, #tpu.memory_space<vmem>>) attributes {dimension_semantics = [#tpu.dimension_semantics<parallel>], iteration_bounds = array<i64: 1>, scalar_prefetch = 0 : i64, scratch_operands = 0 : i64, tpu.core_type = #tpu.core_type<tc>, window_params = [{pipeline_mode = #tpu.pipeline_mode<synchronous>, transform_indices = @transform_0, window_bounds = array<i64: 4, 4>}, {pipeline_mode = #tpu.pipeline_mode<synchronous>, transform_indices = @transform_1, window_bounds = array<i64: 4, 1>}, {pipeline_mode = #tpu.pipeline_mode<synchronous>, transform_indices = @transform_2, window_bounds = array<i64: 16, 16>}, {pipeline_mode = #tpu.pipeline_mode<synchronous>, transform_indices = @transform_3, window_bounds = array<i64: 1, 16>}, {transform_indices = @transform_4, window_bounds = array<i64: 2, 4, 16>}, {transform_indices = @transform_5, window_bounds = array<i64: 2, 4, 16>}]} {
    %c0 = arith.constant 0 : index
    %c0_0 = arith.constant 0 : index
    %0 = vector.load %arg1[%c0, %c0_0] : memref<4x4xf32, #tpu.memory_space<vmem>>, vector<4x4xf32>
    %c0_1 = arith.constant 0 : index
    %c0_2 = arith.constant 0 : index
    %1 = vector.load %arg2[%c0_1, %c0_2] : memref<4x1xf32, #tpu.memory_space<vmem>>, vector<4x1xf32>
    %c0_3 = arith.constant 0 : index
    %c0_4 = arith.constant 0 : index
    %2 = vector.load %arg3[%c0_3, %c0_4] : memref<16x16xf32, #tpu.memory_space<vmem>>, vector<16x16xf32>
    %c0_5 = arith.constant 0 : index
    %c0_6 = arith.constant 0 : index
    %3 = vector.load %arg4[%c0_5, %c0_6] : memref<1x16xf32, #tpu.memory_space<vmem>>, vector<1x16xf32>
    %c0_7 = arith.constant 0 : index
    %c0_8 = arith.constant 0 : index
    %c0_9 = arith.constant 0 : index
    %4 = vector.load %arg5[%c0_7, %c0_8, %c0_9] : memref<2x4x16xf32, #tpu.memory_space<vmem>>, vector<1x4x16xf32>
    %5 = vector.shape_cast %4 : vector<1x4x16xf32> to vector<4x16xf32>
    %cst = arith.constant dense<0.000000e+00> : vector<4x16xf32>
    %6 = tpu.matmul %0, %5, %cst {dimension_numbers = #tpu.dot_dimension_numbers<[1], [0], [0], [1], [0, 0, 1, 1], [], []>} : vector<4x4xf32>, vector<4x16xf32>, vector<4x16xf32> -> vector<4x16xf32>
    %7 = vector.broadcast %1 : vector<4x1xf32> to vector<4x16xf32>
    %8 = arith.addf %6, %7 : vector<4x16xf32>
    %cst_10 = arith.constant dense<0.000000e+00> : vector<4x16xf32>
    %9 = tpu.matmul %8, %2, %cst_10 {dimension_numbers = #tpu.dot_dimension_numbers<[1], [0], [0], [1], [0, 0, 1, 1], [], []>} : vector<4x16xf32>, vector<16x16xf32>, vector<4x16xf32> -> vector<4x16xf32>
    %10 = vector.broadcast %3 : vector<1x16xf32> to vector<4x16xf32>
    %11 = arith.addf %9, %10 : vector<4x16xf32>
    %c0_11 = arith.constant 0 : index
    %c0_12 = arith.constant 0 : index
    %c0_13 = arith.constant 0 : index
    %12 = vector.load %arg6[%c0_11, %c0_12, %c0_13] : memref<2x4x16xf32, #tpu.memory_space<vmem>>, vector<1x4x16xf32>
    %13 = vector.shape_cast %12 : vector<1x4x16xf32> to vector<4x16xf32>
    %14 = vector.shape_cast %11 : vector<4x16xf32> to vector<1x4x16xf32>
    tpu.vector_store %arg6[%c0_11, %c0_12, %c0_13], %14 {strides = array<i32>} : memref<2x4x16xf32, #tpu.memory_space<vmem>>, vector<1x4x16xf32>,
    %c1 = arith.constant 1 : index
    %c0_14 = arith.constant 0 : index
    %c0_15 = arith.constant 0 : index
    %15 = vector.load %arg5[%c1, %c0_14, %c0_15] : memref<2x4x16xf32, #tpu.memory_space<vmem>>, vector<1x4x16xf32>
    %16 = vector.shape_cast %15 : vector<1x4x16xf32> to vector<4x16xf32>
    %cst_16 = arith.constant dense<0.000000e+00> : vector<4x16xf32>
    %17 = tpu.matmul %0, %16, %cst_16 {dimension_numbers = #tpu.dot_dimension_numbers<[1], [0], [0], [1], [0, 0, 1, 1], [], []>} : vector<4x4xf32>, vector<4x16xf32>, vector<4x16xf32> -> vector<4x16xf32>
    %18 = vector.broadcast %1 : vector<4x1xf32> to vector<4x16xf32>
    %19 = arith.addf %17, %18 : vector<4x16xf32>
    %cst_17 = arith.constant dense<0.000000e+00> : vector<4x16xf32>
    %20 = tpu.matmul %19, %2, %cst_17 {dimension_numbers = #tpu.dot_dimension_numbers<[1], [0], [0], [1], [0, 0, 1, 1], [], []>} : vector<4x16xf32>, vector<16x16xf32>, vector<4x16xf32> -> vector<4x16xf32>
    %21 = vector.broadcast %3 : vector<1x16xf32> to vector<4x16xf32>
    %22 = arith.addf %20, %21 : vector<4x16xf32>
    %c1_18 = arith.constant 1 : index
    %c0_19 = arith.constant 0 : index
    %c0_20 = arith.constant 0 : index
    %23 = vector.load %arg6[%c1_18, %c0_19, %c0_20] : memref<2x4x16xf32, #tpu.memory_space<vmem>>, vector<1x4x16xf32>
    %24 = vector.shape_cast %23 : vector<1x4x16xf32> to vector<4x16xf32>
    %25 = vector.shape_cast %22 : vector<4x16xf32> to vector<1x4x16xf32>
    tpu.vector_store %arg6[%c1_18, %c0_19, %c0_20], %25 {strides = array<i32>} : memref<2x4x16xf32, #tpu.memory_space<vmem>>, vector<1x4x16xf32>,
    return
  }
  func.func @transform_0(%arg0: i32) -> (i32, i32) {
    %c0_i32 = arith.constant 0 : i32
    %c0_i32_0 = arith.constant 0 : i32
    %c0_i32_1 = arith.constant 0 : i32
    return %c0_i32, %c0_i32_0 : i32, i32
  }
  func.func @transform_1(%arg0: i32) -> (i32, i32) {
    %c0_i32 = arith.constant 0 : i32
    %c0_i32_0 = arith.constant 0 : i32
    %c0_i32_1 = arith.constant 0 : i32
    return %c0_i32, %c0_i32_0 : i32, i32
  }
  func.func @transform_2(%arg0: i32) -> (i32, i32) {
    %c0_i32 = arith.constant 0 : i32
    %c0_i32_0 = arith.constant 0 : i32
    %c0_i32_1 = arith.constant 0 : i32
    return %c0_i32, %c0_i32_0 : i32, i32
  }
  func.func @transform_3(%arg0: i32) -> (i32, i32) {
    %c0_i32 = arith.constant 0 : i32
    %c0_i32_0 = arith.constant 0 : i32
    %c0_i32_1 = arith.constant 0 : i32
    return %c0_i32, %c0_i32_0 : i32, i32
  }
  func.func @transform_4(%arg0: i32) -> (i32, i32, i32) {
    %c0_i32 = arith.constant 0 : i32
    %c0_i32_0 = arith.constant 0 : i32
    %c0_i32_1 = arith.constant 0 : i32
    return %arg0, %c0_i32, %c0_i32_0 : i32, i32, i32
  }
  func.func @transform_5(%arg0: i32) -> (i32, i32, i32) {
    %c0_i32 = arith.constant 0 : i32
    %c0_i32_0 = arith.constant 0 : i32
    %c0_i32_1 = arith.constant 0 : i32
    return %arg0, %c0_i32, %c0_i32_0 : i32, i32, i32
  }
}

</mosaic_0001>

<llo_original>
// kernel: tpu_custom_call.1
$region0: #{tpu_custom_call.1}
  #allocation0 [shape = 'u32[]', space=smem, size = 0x4, offset = 0x4, fixed_abs, tag = 'smem constant byte address 0x4 - core index']
  #allocation1 [shape = 'u32[144,128]{1,0:T(1,128)}', space=vmem, size = 0x12000, scoped, tag = 'internal scratch']
  %s0 = inlined_call_operand.vmem [shape: f32[4,4], index: 0, kind: input, shape index: {}]
  %s1 = inlined_call_operand.vmem [shape: f32[4,1], index: 1, kind: input, shape index: {}]
  %s2 = inlined_call_operand.hbm [shape: f32[16,16], index: 2, kind: input, shape index: {}]
  %s3 = inlined_call_operand.vmem [shape: f32[1,16], index: 3, kind: input, shape index: {}]
  %s4 = inlined_call_operand.vmem [shape: f32[2,4,16], index: 4, kind: input, shape index: {}]
  %s5 = inlined_call_operand.hbm [shape: f32[2,4,16], index: 5, kind: output, shape index: {}]
  %s6 = sld [smem:[#allocation0]]
  $region34: #{tpu_custom_call.1} parent=0
    _
  %s8 = ssub.s32 1, %s6
  %s9 = scalar_select 0, %s8, %s6
  $region1: #{tpu_custom_call.1} parent=0
    #allocation2 [shape = 'u8[8192]{0}', space=vmem, size = 0x2000, scoped, tag = 'input window, operand 2, single buffered']
    #allocation3 [shape = 's32[1]{0}', space=sflag, size = 0x4, scoped, tag = 'scoped memory for tpu_custom_call.1']
    #allocation4 [shape = 's32[1]{0}', space=sflag, size = 0x4, scoped, tag = 'scoped memory for tpu_custom_call.1']
    #allocation5 [shape = 'u8[4096]{0}', space=vmem, size = 0x1000, scoped, tag = 'output window, operand 0, single buffered']
    %10 = vsyncpa [#allocation3], 0
    %11 = vsyncpa [#allocation4], 0
    // Predicated region
    $region2: #{tpu_custom_call.1} parent=1 // pred_check
      _
    $region3: #{tpu_custom_call.1} parent=1 // pred_check_branch
      %13 = sbr.rel (0) target = $region5
    $region4: #{tpu_custom_call.1} parent=1 // pred_region
      _
    $region5: #{tpu_custom_call.1} parent=1 // pred_fallthru
      _
    // Predicated region
    $region6: #{tpu_custom_call.1} parent=1 // pred_check
      _
    $region7: #{tpu_custom_call.1} parent=1 // pred_check_branch
      %15 = sbr.rel (0) target = $region9
    $region8: #{tpu_custom_call.1} parent=1 // pred_region
      _
    $region9: #{tpu_custom_call.1} parent=1 // pred_fallthru
      _
    // Predicated region
    $region10: #{tpu_custom_call.1} parent=1 // pred_check
      _
    $region11: #{tpu_custom_call.1} parent=1 // pred_check_branch
      %17 = sbr.rel (0) target = $region13
    $region12: #{tpu_custom_call.1} parent=1 // pred_region
      %s19 = ssub.s32 256, 256
      %20 = vsyncadd [#allocation3], %s19
      %s21 = sshll.u32 [#allocation2], 4
      %s22 = int_to_ptr.vmem [resolvable:$true] %s21
      %27 = dma.hbm_to_vmem [thread:$0]  %s2, 256, %s22, [#allocation3], 128, 128, 8
    $region13: #{tpu_custom_call.1} parent=1 // pred_fallthru
      _
    // Predicated region
    $region14: #{tpu_custom_call.1} parent=1 // pred_check
      _
    $region15: #{tpu_custom_call.1} parent=1 // pred_check_branch
      %29 = sbr.rel (0) target = $region17
    $region16: #{tpu_custom_call.1} parent=1 // pred_region
      _
    $region17: #{tpu_custom_call.1} parent=1 // pred_fallthru
      _
    // Predicated region
    $region18: #{tpu_custom_call.1} parent=1 // pred_check
      _
    $region19: #{tpu_custom_call.1} parent=1 // pred_check_branch
      %31 = sbr.rel (0) target = $region21
    $region20: #{tpu_custom_call.1} parent=1 // pred_region
      _
    $region21: #{tpu_custom_call.1} parent=1 // pred_fallthru
      _
    // Predicated region
    $region22: #{tpu_custom_call.1} parent=1 // pred_check
      _
    $region23: #{tpu_custom_call.1} parent=1 // pred_check_branch
      %33 = sbr.rel (0) target = $region25
    $region24: #{tpu_custom_call.1} parent=1 // pred_region
      %34 = dma.done [#allocation3], 256
    $region25: #{tpu_custom_call.1} parent=1 // pred_fallthru
      _
    %v35 = vld [vmem:[%s0] sm:$0xf]
    %v36 = vld [vmem:[%s1] sm:$0xf]
    %v37 = vld [vmem:[#allocation2] sm:$0xff]
    %v38 = vld [vmem:[#allocation2 + $0x8] sm:$0xff]
    %v39 = vld [vmem:[%s3] sm:$0x1]
    %v40 = vld [vmem:[%s4] sm:$0xf]
    %42 = vset.pattern.permute.xlu0 0
    %43 = vperm.xlu0 %42, %v36
    %v44 = vpop.permute.xlu0 %43
    %vm46 = vcmask 31744
    %v48 = vsel %vm46, %v35, 0
    %vm50 = vcmask 1043456
    %v52 = vsel %vm50, %v40, 0
    %54 = vmatprep.subr.mxu0 0.0
    %55 = vmatpush1.msra.mxu0 %v52
    %56 = vmatprep.subr.mxu0 0.0
    %57 = vmatpush1.msra.mxu0 0.0
    %58 = vmatprep.subr.mxu0 0.0
    %59 = vmatpush1.msra.mxu0 0.0
    %60 = vmatprep.subr.mxu0 0.0
    %61 = vmatpush1.msra.mxu0 0.0
    %62 = vmatprep.subr.mxu0 0.0
    %63 = vmatpush1.msra.mxu0 0.0
    %64 = vmatprep.subr.mxu0 0.0
    %65 = vmatpush1.msra.mxu0 0.0
    %66 = vmatprep.subr.mxu0 0.0
    %67 = vmatpush1.msra.mxu0 0.0
    %68 = vmatprep.subr.mxu0 0.0
    %69 = vmatpush1.msra.mxu0 0.0
    %70 = vmatprep.subr.mxu0 0.0
    %71 = vmatpush1.msra.mxu0 0.0
    %72 = vmatprep.subr.mxu0 0.0
    %73 = vmatpush1.msra.mxu0 0.0
    %74 = vmatprep.subr.mxu0 0.0
    %75 = vmatpush1.msra.mxu0 0.0
    %76 = vmatprep.subr.mxu0 0.0
    %77 = vmatpush1.msra.mxu0 0.0
    %78 = vmatprep.subr.mxu0 0.0
    %79 = vmatpush1.msra.mxu0 0.0
    %80 = vmatprep.subr.mxu0 0.0
    %81 = vmatpush1.msra.mxu0 0.0
    %82 = vmatprep.subr.mxu0 0.0
    %83 = vmatpush1.msra.mxu0 0.0
    %84 = vmatprep.subr.mxu0 0.0
    %85 = vmatpush1.msra.mxu0 0.0
    %86 = vmatprep.subr.mxu0 0.0
    %87 = vmatpush1.msra.mxu0 0.0
    %88 = vmatprep.subr.mxu0 0.0
    %89 = vmatpush1.msra.mxu0 0.0
    %90 = vmatprep.subr.mxu0 0.0
    %91 = vmatpush1.msra.mxu0 0.0
    %92 = vmatprep.subr.mxu0 0.0
    %93 = vmatpush1.msra.mxu0 0.0
    %94 = vmatprep.subr.mxu0 0.0
    %95 = vmatpush1.msra.mxu0 0.0
    %96 = vmatprep.subr.mxu0 0.0
    %97 = vmatpush1.msra.mxu0 0.0
    %98 = vmatprep.subr.mxu0 0.0
    %99 = vmatpush1.msra.mxu0 0.0
    %100 = vmatprep.subr.mxu0 0.0
    %101 = vmatpush1.msra.mxu0 0.0
    %102 = vmatprep.subr.mxu0 0.0
    %103 = vmatpush1.msra.mxu0 0.0
    %104 = vmatprep.subr.mxu0 0.0
    %105 = vmatpush1.msra.mxu0 0.0
    %106 = vmatprep.subr.mxu0 0.0
    %107 = vmatpush1.msra.mxu0 0.0
    %108 = vmatprep.subr.mxu0 0.0
    %109 = vmatpush1.msra.mxu0 0.0
    %110 = vmatprep.subr.mxu0 0.0
    %111 = vmatpush1.msra.mxu0 0.0
    %112 = vmatprep.subr.mxu0 0.0
    %113 = vmatpush1.msra.mxu0 0.0
    %114 = vmatprep.subr.mxu0 0.0
    %115 = vmatpush1.msra.mxu0 0.0
    %116 = vmatprep.subr.mxu0 0.0
    %117 = vmatpush1.msra.mxu0 0.0
    %118 = vmatprep.mubr.f32.mxu0 0.0
    %119 = vmatmul.mubr.f32.gmra.mrb[0].mxu0 %v48
    %v120 = vpop.f32.mrb[0].mxu0
    %v121 = vadd.f32 %v44, %v120
    %v122 = vpop.f32.mrb[0].mxu0
    %123 = vdwg.mxu0
    %v125 = vlaneseq
    %v126 = vshrl.u32 %v125, 7
    %v127 = vsub.s32 0, %v126
    %v128 = vrot.slane %v39, %v127
    %vm130 = vcmask 130048
    %v132 = vsel %vm130, %v121, 0
    %134 = vmatprep.subr.mxu0 0.0
    %135 = vmatpush1.msra.mxu0 %v37
    %136 = vmatprep.subr.mxu0 0.0
    %137 = vmatpush1.msra.mxu0 %v38
    %138 = vmatprep.subr.mxu0 0.0
    %139 = vmatpush1.msra.mxu0 0.0
    %140 = vmatprep.subr.mxu0 0.0
    %141 = vmatpush1.msra.mxu0 0.0
    %142 = vmatprep.subr.mxu0 0.0
    %143 = vmatpush1.msra.mxu0 0.0
    %144 = vmatprep.subr.mxu0 0.0
    %145 = vmatpush1.msra.mxu0 0.0
    %146 = vmatprep.subr.mxu0 0.0
    %147 = vmatpush1.msra.mxu0 0.0
    %148 = vmatprep.subr.mxu0 0.0
    %149 = vmatpush1.msra.mxu0 0.0
    %150 = vmatprep.subr.mxu0 0.0
    %151 = vmatpush1.msra.mxu0 0.0
    %152 = vmatprep.subr.mxu0 0.0
    %153 = vmatpush1.msra.mxu0 0.0
    %154 = vmatprep.subr.mxu0 0.0
    %155 = vmatpush1.msra.mxu0 0.0
    %156 = vmatprep.subr.mxu0 0.0
    %157 = vmatpush1.msra.mxu0 0.0
    %158 = vmatprep.subr.mxu0 0.0
    %159 = vmatpush1.msra.mxu0 0.0
    %160 = vmatprep.subr.mxu0 0.0
    %161 = vmatpush1.msra.mxu0 0.0
    %162 = vmatprep.subr.mxu0 0.0
    %163 = vmatpush1.msra.mxu0 0.0
    %164 = vmatprep.subr.mxu0 0.0
    %165 = vmatpush1.msra.mxu0 0.0
    %166 = vmatprep.subr.mxu0 0.0
    %167 = vmatpush1.msra.mxu0 0.0
    %168 = vmatprep.subr.mxu0 0.0
    %169 = vmatpush1.msra.mxu0 0.0
    %170 = vmatprep.subr.mxu0 0.0
    %171 = vmatpush1.msra.mxu0 0.0
    %172 = vmatprep.subr.mxu0 0.0
    %173 = vmatpush1.msra.mxu0 0.0
    %174 = vmatprep.subr.mxu0 0.0
    %175 = vmatpush1.msra.mxu0 0.0
    %176 = vmatprep.subr.mxu0 0.0
    %177 = vmatpush1.msra.mxu0 0.0
    %178 = vmatprep.subr.mxu0 0.0
    %179 = vmatpush1.msra.mxu0 0.0
    %180 = vmatprep.subr.mxu0 0.0
    %181 = vmatpush1.msra.mxu0 0.0
    %182 = vmatprep.subr.mxu0 0.0
    %183 = vmatpush1.msra.mxu0 0.0
    %184 = vmatprep.subr.mxu0 0.0
    %185 = vmatpush1.msra.mxu0 0.0
    %186 = vmatprep.subr.mxu0 0.0
    %187 = vmatpush1.msra.mxu0 0.0
    %188 = vmatprep.subr.mxu0 0.0
    %189 = vmatpush1.msra.mxu0 0.0
    %190 = vmatprep.subr.mxu0 0.0
    %191 = vmatpush1.msra.mxu0 0.0
    %192 = vmatprep.subr.mxu0 0.0
    %193 = vmatpush1.msra.mxu0 0.0
    %194 = vmatprep.subr.mxu0 0.0
    %195 = vmatpush1.msra.mxu0 0.0
    %196 = vmatprep.subr.mxu0 0.0
    %197 = vmatpush1.msra.mxu0 0.0
    %198 = vmatprep.mubr.f32.mxu0 0.0
    %199 = vmatmul.mubr.f32.gmra.mrb[0].mxu0 %v132
    %v200 = vpop.f32.mrb[0].mxu0
    %v201 = vadd.f32 %v128, %v200
    %v202 = vpop.f32.mrb[0].mxu0
    %203 = vdwg.mxu0
    %vm204 = vcmask 125952
    %205 = vst.msk [vmem:[#allocation5] sm:$0xf] %vm204, %v201
    %s206 = scalar_lea.vmem %s4, 4
    %v207 = vld [vmem:[%s206] sm:$0xf]
    %v209 = vsel %vm50, %v207, 0
    %211 = vmatprep.subr.mxu0 0.0
    %212 = vmatpush1.msra.mxu0 %v209
    %213 = vmatprep.subr.mxu0 0.0
    %214 = vmatpush1.msra.mxu0 0.0
    %215 = vmatprep.subr.mxu0 0.0
    %216 = vmatpush1.msra.mxu0 0.0
    %217 = vmatprep.subr.mxu0 0.0
    %218 = vmatpush1.msra.mxu0 0.0
    %219 = vmatprep.subr.mxu0 0.0
    %220 = vmatpush1.msra.mxu0 0.0
    %221 = vmatprep.subr.mxu0 0.0
    %222 = vmatpush1.msra.mxu0 0.0
    %223 = vmatprep.subr.mxu0 0.0
    %224 = vmatpush1.msra.mxu0 0.0
    %225 = vmatprep.subr.mxu0 0.0
    %226 = vmatpush1.msra.mxu0 0.0
    %227 = vmatprep.subr.mxu0 0.0
    %228 = vmatpush1.msra.mxu0 0.0
    %229 = vmatprep.subr.mxu0 0.0
    %230 = vmatpush1.msra.mxu0 0.0
    %231 = vmatprep.subr.mxu0 0.0
    %232 = vmatpush1.msra.mxu0 0.0
    %233 = vmatprep.subr.mxu0 0.0
    %234 = vmatpush1.msra.mxu0 0.0
    %235 = vmatprep.subr.mxu0 0.0
    %236 = vmatpush1.msra.mxu0 0.0
    %237 = vmatprep.subr.mxu0 0.0
    %238 = vmatpush1.msra.mxu0 0.0
    %239 = vmatprep.subr.mxu0 0.0
    %240 = vmatpush1.msra.mxu0 0.0
    %241 = vmatprep.subr.mxu0 0.0
    %242 = vmatpush1.msra.mxu0 0.0
    %243 = vmatprep.subr.mxu0 0.0
    %244 = vmatpush1.msra.mxu0 0.0
    %245 = vmatprep.subr.mxu0 0.0
    %246 = vmatpush1.msra.mxu0 0.0
    %247 = vmatprep.subr.mxu0 0.0
    %248 = vmatpush1.msra.mxu0 0.0
    %249 = vmatprep.subr.mxu0 0.0
    %250 = vmatpush1.msra.mxu0 0.0
    %251 = vmatprep.subr.mxu0 0.0
    %252 = vmatpush1.msra.mxu0 0.0
    %253 = vmatprep.subr.mxu0 0.0
    %254 = vmatpush1.msra.mxu0 0.0
    %255 = vmatprep.subr.mxu0 0.0
    %256 = vmatpush1.msra.mxu0 0.0
    %257 = vmatprep.subr.mxu0 0.0
    %258 = vmatpush1.msra.mxu0 0.0
    %259 = vmatprep.subr.mxu0 0.0
    %260 = vmatpush1.msra.mxu0 0.0
    %261 = vmatprep.subr.mxu0 0.0
    %262 = vmatpush1.msra.mxu0 0.0
    %263 = vmatprep.subr.mxu0 0.0
    %264 = vmatpush1.msra.mxu0 0.0
    %265 = vmatprep.subr.mxu0 0.0
    %266 = vmatpush1.msra.mxu0 0.0
    %267 = vmatprep.subr.mxu0 0.0
    %268 = vmatpush1.msra.mxu0 0.0
    %269 = vmatprep.subr.mxu0 0.0
    %270 = vmatpush1.msra.mxu0 0.0
    %271 = vmatprep.subr.mxu0 0.0
    %272 = vmatpush1.msra.mxu0 0.0
    %273 = vmatprep.subr.mxu0 0.0
    %274 = vmatpush1.msra.mxu0 0.0
    %275 = vmatprep.mubr.f32.mxu0 0.0
    %276 = vmatmul.mubr.f32.gmra.mrb[0].mxu0 %v48
    %v277 = vpop.f32.mrb[0].mxu0
    %v278 = vadd.f32 %v44, %v277
    %v279 = vpop.f32.mrb[0].mxu0
    %280 = vdwg.mxu0
    %v282 = vsel %vm130, %v278, 0
    %284 = vmatprep.subr.mxu0 0.0
    %285 = vmatpush1.msra.mxu0 %v37
    %286 = vmatprep.subr.mxu0 0.0
    %287 = vmatpush1.msra.mxu0 %v38
    %288 = vmatprep.subr.mxu0 0.0
    %289 = vmatpush1.msra.mxu0 0.0
    %290 = vmatprep.subr.mxu0 0.0
    %291 = vmatpush1.msra.mxu0 0.0
    %292 = vmatprep.subr.mxu0 0.0
    %293 = vmatpush1.msra.mxu0 0.0
    %294 = vmatprep.subr.mxu0 0.0
    %295 = vmatpush1.msra.mxu0 0.0
    %296 = vmatprep.subr.mxu0 0.0
    %297 = vmatpush1.msra.mxu0 0.0
    %298 = vmatprep.subr.mxu0 0.0
    %299 = vmatpush1.msra.mxu0 0.0
    %300 = vmatprep.subr.mxu0 0.0
    %301 = vmatpush1.msra.mxu0 0.0
    %302 = vmatprep.subr.mxu0 0.0
    %303 = vmatpush1.msra.mxu0 0.0
    %304 = vmatprep.subr.mxu0 0.0
    %305 = vmatpush1.msra.mxu0 0.0
    %306 = vmatprep.subr.mxu0 0.0
    %307 = vmatpush1.msra.mxu0 0.0
    %308 = vmatprep.subr.mxu0 0.0
    %309 = vmatpush1.msra.mxu0 0.0
    %310 = vmatprep.subr.mxu0 0.0
    %311 = vmatpush1.msra.mxu0 0.0
    %312 = vmatprep.subr.mxu0 0.0
    %313 = vmatpush1.msra.mxu0 0.0
    %314 = vmatprep.subr.mxu0 0.0
    %315 = vmatpush1.msra.mxu0 0.0
    %316 = vmatprep.subr.mxu0 0.0
    %317 = vmatpush1.msra.mxu0 0.0
    %318 = vmatprep.subr.mxu0 0.0
    %319 = vmatpush1.msra.mxu0 0.0
    %320 = vmatprep.subr.mxu0 0.0
    %321 = vmatpush1.msra.mxu0 0.0
    %322 = vmatprep.subr.mxu0 0.0
    %323 = vmatpush1.msra.mxu0 0.0
    %324 = vmatprep.subr.mxu0 0.0
    %325 = vmatpush1.msra.mxu0 0.0
    %326 = vmatprep.subr.mxu0 0.0
    %327 = vmatpush1.msra.mxu0 0.0
    %328 = vmatprep.subr.mxu0 0.0
    %329 = vmatpush1.msra.mxu0 0.0
    %330 = vmatprep.subr.mxu0 0.0
    %331 = vmatpush1.msra.mxu0 0.0
    %332 = vmatprep.subr.mxu0 0.0
    %333 = vmatpush1.msra.mxu0 0.0
    %334 = vmatprep.subr.mxu0 0.0
    %335 = vmatpush1.msra.mxu0 0.0
    %336 = vmatprep.subr.mxu0 0.0
    %337 = vmatpush1.msra.mxu0 0.0
    %338 = vmatprep.subr.mxu0 0.0
    %339 = vmatpush1.msra.mxu0 0.0
    %340 = vmatprep.subr.mxu0 0.0
    %341 = vmatpush1.msra.mxu0 0.0
    %342 = vmatprep.subr.mxu0 0.0
    %343 = vmatpush1.msra.mxu0 0.0
    %344 = vmatprep.subr.mxu0 0.0
    %345 = vmatpush1.msra.mxu0 0.0
    %346 = vmatprep.subr.mxu0 0.0
    %347 = vmatpush1.msra.mxu0 0.0
    %348 = vmatprep.mubr.f32.mxu0 0.0
    %349 = vmatmul.mubr.f32.gmra.mrb[0].mxu0 %v282
    %v350 = vpop.f32.mrb[0].mxu0
    %v351 = vadd.f32 %v128, %v350
    %v352 = vpop.f32.mrb[0].mxu0
    %353 = vdwg.mxu0
    %s354 = scalar_lea.vmem [#allocation5], 4
    %355 = vst.msk [vmem:[%s354] sm:$0xf] %vm204, %v351
    // Predicated region
    $region26: #{tpu_custom_call.1} parent=1 // pred_check
      _
    $region27: #{tpu_custom_call.1} parent=1 // pred_check_branch
      %357 = sbr.rel (0) target = $region29
    $region28: #{tpu_custom_call.1} parent=1 // pred_region
      %s359 = ssub.s32 128, 128
      %360 = vsyncadd [#allocation4], %s359
      %s361 = sshll.u32 [#allocation5], 4
      %s362 = int_to_ptr.vmem [resolvable:$true] %s361
      %367 = dma.vmem_to_hbm [thread:$0]  %s362, 128, %s5, [#allocation4], 64, 64, 4
    $region29: #{tpu_custom_call.1} parent=1 // pred_fallthru
      _
    // Predicated region
    $region30: #{tpu_custom_call.1} parent=1 // pred_check
      _
    $region31: #{tpu_custom_call.1} parent=1 // pred_check_branch
      %369 = sbr.rel (0) target = $region33
    $region32: #{tpu_custom_call.1} parent=1 // pred_region
      %370 = dma.done [#allocation4], 128
    $region33: #{tpu_custom_call.1} parent=1 // pred_fallthru
      _
    %371 = vsyncpa [#allocation3], 1
    %372 = vsyncpa [#allocation4], 1

</llo_original>
